<compile_context>
chip_gen: v7x
topology: tpu7x:2x2x1
jax: 0.10.0
libtpu: 0.0.40
codegen_flags: <defaults>
</compile_context>

<pallas_src>
import functools

import jax
import jax.numpy as jnp
from jax.experimental import pallas as pl
from jax.experimental.pallas import tpu as pltpu


def _round_up(a, b):
    return ((a + b - 1) // b) * b


def _lmcc_kernel(x_ref, w_ref, wnorm_ref, label_ref, out_ref, prod_ref, *,
                 s, m, eps, tn, matmul_dtype):
    # f32 view for exact norm math (cheap: (tm, D) reduce per tile).
    x_f32 = x_ref[...].astype(jnp.float32)                       # (tm, D)

    # MXU matmul: contract on the shared last (feature) dim -> no transpose of W.
    xm = x_ref[...].astype(matmul_dtype)
    wm = w_ref[...].astype(matmul_dtype)
    ip = jax.lax.dot_general(
        xm, wm,
        dimension_numbers=(((1,), (1,)), ((), ())),
        preferred_element_type=jnp.float32)                      # (tm, tn)

    # Per-row norms. Weight norms are precomputed in the wrapper (hoisted out of
    # the B-tile loop); x norms are computed per tile.
    x_sq = jnp.sum(x_f32 * x_f32, axis=1, keepdims=True)         # (tm, 1)
    x_norm = jnp.sqrt(x_sq)                                      # (tm, 1)
    w_norm = wnorm_ref[...]                                      # (1, tn) f32

    # Small per-row reciprocals instead of a (tm, tn) divide.
    inv_x = 1.0 / x_norm                                         # (tm, 1)
    inv_w = 1.0 / w_norm                                         # (1, tn)

    # torch .clamp(min=eps) on the outer product of norms, preserved exactly via
    # a compare/select (zero-norm padded rows/cols fall into the eps branch).
    prod_norm = x_norm * w_norm                                  # (tm, tn)
    inv_denom = jnp.where(prod_norm >= eps, inv_x * inv_w, 1.0 / eps)
    cosine = ip * inv_denom

    # Fused margin:  s*(cosine - one_hot*m) == where(target, s*cos - s*m, s*cos).
    labels = label_ref[...]                                      # (tm, 1) int32
    class_ids = (pl.program_id(1) * tn
                 + jax.lax.broadcasted_iota(jnp.int32, ip.shape, 1))
    sc = s * cosine
    out_ref[...] = jnp.where(class_ids == labels, sc - (s * m), sc).astype(out_ref.dtype)
    prod_ref[...] = ip.astype(prod_ref.dtype)


def lmcc_forward(x, weight, label, *, s=30.0, m=0.4, eps=1e-8,
                 block_b=128, block_c=256,
                 matmul_dtype=jnp.float32,
                 vmem_limit_bytes=32 * 1024 * 1024):
    """Pallas LMCC forward. x: (B, D) f32, weight: (C, D) f32, label: (B,) int."""
    B, D = x.shape
    C, D2 = weight.shape
    assert D == D2, "in_features mismatch"

    x = x.astype(jnp.float32)
    weight = weight.astype(jnp.float32)

    # Weight row L2 norms, computed once per forward (hoisted out of the B loop),
    # laid out lane-dense as (1, C).
    w_norm = jnp.sqrt(jnp.sum(weight * weight, axis=1))[None, :]  # (1, C)

    label2d = label.reshape(-1, 1).astype(jnp.int32)              # (B, 1)

    # Tile sizes: tm a multiple of 8 (sublanes), tn a multiple of 128 (lanes) so
    # both (tm, tn) output tiles get unmasked vector stores.
    tm = min(block_b, _round_up(B, 8))
    tn = min(block_c, _round_up(C, 128))
    Bp = _round_up(B, tm)
    Cp = _round_up(C, tn)

    if Bp != B:
        x = jnp.pad(x, ((0, Bp - B), (0, 0)))
        label2d = jnp.pad(label2d, ((0, Bp - B), (0, 0)))
    if Cp != C:
        weight = jnp.pad(weight, ((0, Cp - C), (0, 0)))
        w_norm = jnp.pad(w_norm, ((0, 0), (0, Cp - C)))

    grid = (Bp // tm, Cp // tn)

    kernel = functools.partial(
        _lmcc_kernel, s=float(s), m=float(m), eps=float(eps),
        tn=tn, matmul_dtype=matmul_dtype)

    out_shapes = (
        jax.ShapeDtypeStruct((Bp, Cp), jnp.float32),  # output (scaled margin cosine)
        jax.ShapeDtypeStruct((Bp, Cp), jnp.float32),  # prod   (raw inner product)
    )

    bytes_in = (Bp * D + Cp * D + Cp + Bp) * 4
    bytes_out = 2 * Bp * Cp * 4
    cost = pl.CostEstimate(
        flops=2 * Bp * Cp * D,
        transcendentals=Bp * grid[1] + Cp,
        bytes_accessed=bytes_in + bytes_out)

    out, prod = pl.pallas_call(
        kernel,
        out_shape=out_shapes,
        grid_spec=pltpu.PrefetchScalarGridSpec(
            num_scalar_prefetch=0,
            grid=grid,
            in_specs=[
                pl.BlockSpec((tm, D), lambda bi, ci: (bi, 0)),   # x tile
                pl.BlockSpec((tn, D), lambda bi, ci: (ci, 0)),   # weight tile
                pl.BlockSpec((1, tn), lambda bi, ci: (0, ci)),   # weight norms
                pl.BlockSpec((tm, 1), lambda bi, ci: (bi, 0)),   # labels
            ],
            out_specs=[
                pl.BlockSpec((tm, tn), lambda bi, ci: (bi, ci)),
                pl.BlockSpec((tm, tn), lambda bi, ci: (bi, ci)),
            ],
        ),
        compiler_params=pltpu.CompilerParams(
            dimension_semantics=("parallel", "parallel"),
            vmem_limit_bytes=vmem_limit_bytes),
        cost_estimate=cost,
    )(x, weight, w_norm, label2d)

    return out[:B, :C], prod[:B, :C]


def _lmcc_ref(x, weight, label, *, s=30.0, m=0.4, eps=1e-8):
    ip = x @ weight.T
    w1 = jnp.linalg.norm(x, axis=1)
    w2 = jnp.linalg.norm(weight, axis=1)
    cosine = ip / jnp.maximum(jnp.outer(w1, w2), eps)
    one_hot = jax.nn.one_hot(label, weight.shape[0], dtype=jnp.float32)
    return s * (cosine - one_hot * m), ip


if __name__ == "__main__":
    def make_inputs(key, B, D, C):
        kx, kw, kl = jax.random.split(key, 3)
        xs = jax.random.normal(kx, (B, D), dtype=jnp.float32)
        bound = (6.0 / (D + C)) ** 0.5      # xavier_uniform_ bound for (C, D)
        ws = jax.random.uniform(kw, (C, D), dtype=jnp.float32,
                                minval=-bound, maxval=bound)
        lbl = jax.random.randint(kl, (B,), 0, C, dtype=jnp.int32)
        return xs, ws, lbl

    key = jax.random.PRNGKey(0)
    k1, k2 = jax.random.split(key)

    # 1) Module-scale demo shapes: batch=8, in_features=32, out_features=16.
    x, w, lbl = make_inputs(k1, 8, 32, 16)
    out, prod = lmcc_forward(x, w, lbl, s=30.0, m=0.4)
    out = jax.block_until_ready(out)
    prod = jax.block_until_ready(prod)
    r_out, r_prod = _lmcc_ref(x, w, lbl, s=30.0, m=0.4)
    assert jnp.allclose(out, r_out, atol=1e-4, rtol=1e-4), "output mismatch (small)"
    assert jnp.allclose(prod, r_prod, atol=1e-4, rtol=1e-4), "prod mismatch (small)"

    # 2) Multi-tile grid with padding on both axes (B=300 -> 3 B-tiles, C=520 -> 3 C-tiles).
    x2, w2, lbl2 = make_inputs(k2, 300, 64, 520)
    out2, prod2 = lmcc_forward(x2, w2, lbl2, s=30.0, m=0.4)
    out2 = jax.block_until_ready(out2)
    prod2 = jax.block_until_ready(prod2)
    r_out2, r_prod2 = _lmcc_ref(x2, w2, lbl2, s=30.0, m=0.4)
    assert jnp.allclose(out2, r_out2, atol=1e-3, rtol=1e-3), "output mismatch (tiled)"
    assert jnp.allclose(prod2, r_prod2, atol=1e-3, rtol=1e-3), "prod mismatch (tiled)"

    # 3) Optional bf16 MXU fast path (f32 accumulation); looser tolerance expected.
    out_bf, prod_bf = lmcc_forward(x2, w2, lbl2, s=30.0, m=0.4,
                                   matmul_dtype=jnp.bfloat16)
    out_bf = jax.block_until_ready(out_bf)
    prod_bf = jax.block_until_ready(prod_bf)
    assert jnp.allclose(out_bf, r_out2, atol=0.5, rtol=5e-2), "output mismatch (bf16)"
    assert jnp.allclose(prod_bf, r_prod2, atol=0.5, rtol=5e-2), "prod mismatch (bf16)"

    print("KERNEL_OK")
</pallas_src>

<mosaic_0001>
module attributes {stable_mosaic.version = 11 : i64} {
  func.func @_lmcc_kernel(%arg0: i32, %arg1: i32, %arg2: memref<8x32xf32, #tpu.memory_space<vmem>>, %arg3: memref<128x32xf32, #tpu.memory_space<vmem>>, %arg4: memref<1x128xf32, #tpu.memory_space<vmem>>, %arg5: memref<8x1xi32, #tpu.memory_space<vmem>>, %arg6: memref<8x128xf32, #tpu.memory_space<vmem>>, %arg7: memref<8x128xf32, #tpu.memory_space<vmem>>) attributes {dimension_semantics = [#tpu.dimension_semantics<parallel>, #tpu.dimension_semantics<parallel>], iteration_bounds = array<i64: 1, 1>, scalar_prefetch = 0 : i64, scratch_operands = 0 : i64, tpu.core_type = #tpu.core_type<tc>, window_params = [{transform_indices = @transform_0, window_bounds = array<i64: 8, 32>}, {transform_indices = @transform_1, window_bounds = array<i64: 128, 32>}, {transform_indices = @transform_2, window_bounds = array<i64: 1, 128>}, {transform_indices = @transform_3, window_bounds = array<i64: 8, 1>}, {transform_indices = @transform_4, window_bounds = array<i64: 8, 128>}, {transform_indices = @transform_5, window_bounds = array<i64: 8, 128>}]} {
    %c0 = arith.constant 0 : index
    %c0_0 = arith.constant 0 : index
    %0 = vector.load %arg2[%c0, %c0_0] : memref<8x32xf32, #tpu.memory_space<vmem>>, vector<8x32xf32>
    %c0_1 = arith.constant 0 : index
    %c0_2 = arith.constant 0 : index
    %1 = vector.load %arg2[%c0_1, %c0_2] : memref<8x32xf32, #tpu.memory_space<vmem>>, vector<8x32xf32>
    %c0_3 = arith.constant 0 : index
    %c0_4 = arith.constant 0 : index
    %2 = vector.load %arg3[%c0_3, %c0_4] : memref<128x32xf32, #tpu.memory_space<vmem>>, vector<128x32xf32>
    %cst = arith.constant dense<0.000000e+00> : vector<8x128xf32>
    %3 = tpu.matmul %1, %2, %cst {dimension_numbers = #tpu.dot_dimension_numbers<[1], [1], [0], [0], [0, 0, 1, 0], [], []>} : vector<8x32xf32>, vector<128x32xf32>, vector<8x128xf32> -> vector<8x128xf32>
    %4 = arith.mulf %0, %0 : vector<8x32xf32>
    %cst_5 = arith.constant dense<0.000000e+00> : vector<8xf32>
    %5 = vector.multi_reduction <add>, %4, %cst_5 [1] : vector<8x32xf32> to vector<8xf32>
    %6 = vector.shape_cast %5 : vector<8xf32> to vector<8x1xf32>
    %7 = math.sqrt %6 : vector<8x1xf32>
    %c0_6 = arith.constant 0 : index
    %c0_7 = arith.constant 0 : index
    %8 = vector.load %arg4[%c0_6, %c0_7] : memref<1x128xf32, #tpu.memory_space<vmem>>, vector<1x128xf32>
    %cst_8 = arith.constant 1.000000e+00 : f32
    %9 = vector.broadcast %cst_8 : f32 to vector<8x1xf32>
    %10 = arith.divf %9, %7 : vector<8x1xf32>
    %cst_9 = arith.constant 1.000000e+00 : f32
    %11 = vector.broadcast %cst_9 : f32 to vector<1x128xf32>
    %12 = arith.divf %11, %8 : vector<1x128xf32>
    %13 = vector.broadcast %7 : vector<8x1xf32> to vector<8x128xf32>
    %14 = vector.broadcast %8 : vector<1x128xf32> to vector<8x128xf32>
    %15 = arith.mulf %13, %14 : vector<8x128xf32>
    %cst_10 = arith.constant 9.99999993E-9 : f32
    %16 = vector.broadcast %cst_10 : f32 to vector<8x128xf32>
    %17 = arith.cmpf oge, %15, %16 : vector<8x128xf32>
    %18 = vector.broadcast %10 : vector<8x1xf32> to vector<8x128xf32>
    %19 = vector.broadcast %12 : vector<1x128xf32> to vector<8x128xf32>
    %20 = arith.mulf %18, %19 : vector<8x128xf32>
    %cst_11 = arith.constant 1.000000e+08 : f32
    %21 = vector.broadcast %cst_11 : f32 to vector<8x128xf32>
    %22 = arith.select %17, %20, %21 : vector<8x128xi1>, vector<8x128xf32>
    %23 = arith.mulf %3, %22 : vector<8x128xf32>
    %c0_12 = arith.constant 0 : index
    %c0_13 = arith.constant 0 : index
    %24 = vector.load %arg5[%c0_12, %c0_13] : memref<8x1xi32, #tpu.memory_space<vmem>>, vector<8x1xi32>
    %c128_i32 = arith.constant 128 : i32
    %25 = arith.muli %arg1, %c128_i32 : i32
    %26 = tpu.iota {dimensions = array<i32: 1>} : vector<8x128xi32>
    %27 = vector.broadcast %25 : i32 to vector<8x128xi32>
    %28 = arith.addi %27, %26 : vector<8x128xi32>
    %cst_14 = arith.constant 3.000000e+01 : f32
    %29 = vector.broadcast %cst_14 : f32 to vector<8x128xf32>
    %30 = arith.mulf %29, %23 : vector<8x128xf32>
    %31 = vector.broadcast %24 : vector<8x1xi32> to vector<8x128xi32>
    %32 = arith.cmpi eq, %28, %31 : vector<8x128xi32>
    %cst_15 = arith.constant 1.200000e+01 : f32
    %33 = vector.broadcast %cst_15 : f32 to vector<8x128xf32>
    %34 = arith.subf %30, %33 : vector<8x128xf32>
    %35 = arith.select %32, %34, %30 : vector<8x128xi1>, vector<8x128xf32>
    %c0_16 = arith.constant 0 : index
    %c0_17 = arith.constant 0 : index
    %36 = vector.load %arg6[%c0_16, %c0_17] : memref<8x128xf32, #tpu.memory_space<vmem>>, vector<8x128xf32>
    tpu.vector_store %arg6[%c0_16, %c0_17], %35 {strides = array<i32>} : memref<8x128xf32, #tpu.memory_space<vmem>>, vector<8x128xf32>,
    %c0_18 = arith.constant 0 : index
    %c0_19 = arith.constant 0 : index
    %37 = vector.load %arg7[%c0_18, %c0_19] : memref<8x128xf32, #tpu.memory_space<vmem>>, vector<8x128xf32>
    tpu.vector_store %arg7[%c0_18, %c0_19], %3 {strides = array<i32>} : memref<8x128xf32, #tpu.memory_space<vmem>>, vector<8x128xf32>,
    return
  }
  func.func @transform_0(%arg0: i32, %arg1: i32) -> (i32, i32) {
    %c0_i32 = arith.constant 0 : i32
    %c0_i32_0 = arith.constant 0 : i32
    return %arg0, %c0_i32 : i32, i32
  }
  func.func @transform_1(%arg0: i32, %arg1: i32) -> (i32, i32) {
    %c0_i32 = arith.constant 0 : i32
    %c0_i32_0 = arith.constant 0 : i32
    return %arg1, %c0_i32 : i32, i32
  }
  func.func @transform_2(%arg0: i32, %arg1: i32) -> (i32, i32) {
    %c0_i32 = arith.constant 0 : i32
    %c0_i32_0 = arith.constant 0 : i32
    return %c0_i32, %arg1 : i32, i32
  }
  func.func @transform_3(%arg0: i32, %arg1: i32) -> (i32, i32) {
    %c0_i32 = arith.constant 0 : i32
    %c0_i32_0 = arith.constant 0 : i32
    return %arg0, %c0_i32 : i32, i32
  }
  func.func @transform_4(%arg0: i32, %arg1: i32) -> (i32, i32) {
    %c0_i32 = arith.constant 0 : i32
    return %arg0, %arg1 : i32, i32
  }
  func.func @transform_5(%arg0: i32, %arg1: i32) -> (i32, i32) {
    %c0_i32 = arith.constant 0 : i32
    return %arg0, %arg1 : i32, i32
  }
}

</mosaic_0001>

<llo_original>
// kernel: tpu_custom_call.1
$region0: #{tpu_custom_call.1}
  #allocation0 [shape = 'u32[]', space=smem, size = 0x4, offset = 0x4, fixed_abs, tag = 'smem constant byte address 0x4 - core index']
  #allocation1 [shape = 'u32[144,128]{1,0:T(1,128)}', space=vmem, size = 0x12000, scoped, tag = 'internal scratch']
  %s0 = inlined_call_operand.vmem [shape: f32[8,32], index: 0, kind: input, shape index: {}]
  %s1 = inlined_call_operand.vmem [shape: f32[128,32], index: 1, kind: input, shape index: {}]
  %s2 = inlined_call_operand.vmem [shape: f32[1,128], index: 2, kind: input, shape index: {}]
  %s3 = inlined_call_operand.vmem [shape: s32[8,1], index: 3, kind: input, shape index: {}]
  %s4 = inlined_call_operand.hbm [shape: f32[8,128], index: 4, kind: output, shape index: {0}]
  %s5 = inlined_call_operand.hbm [shape: f32[8,128], index: 5, kind: output, shape index: {1}]
  %6 = xla_tuple %s4, %s5
  %s7 = sld [smem:[#allocation0]]
  $region34: #{tpu_custom_call.1} parent=0
    _
  %s9 = ssub.s32 1, %s7
  %s10 = scalar_select 0, %s9, %s7
  $region1: #{tpu_custom_call.1} parent=0
    #allocation2 [shape = 'u8[4096]{0}', space=vmem, size = 0x1000, scoped, tag = 'output window, operand 0, single buffered']
    #allocation3 [shape = 's32[1]{0}', space=sflag, size = 0x4, scoped, tag = 'scoped memory for tpu_custom_call.1']
    #allocation4 [shape = 'u8[4096]{0}', space=vmem, size = 0x1000, scoped, tag = 'output window, operand 1, single buffered']
    #allocation5 [shape = 's32[1]{0}', space=sflag, size = 0x4, scoped, tag = 'scoped memory for tpu_custom_call.1']
    %11 = vsyncpa [#allocation3], 0
    %12 = vsyncpa [#allocation5], 0
    // Predicated region
    $region2: #{tpu_custom_call.1} parent=1 // pred_check
      _
    $region3: #{tpu_custom_call.1} parent=1 // pred_check_branch
      %14 = sbr.rel (0) target = $region5
    $region4: #{tpu_custom_call.1} parent=1 // pred_region
      _
    $region5: #{tpu_custom_call.1} parent=1 // pred_fallthru
      _
    // Predicated region
    $region6: #{tpu_custom_call.1} parent=1 // pred_check
      _
    $region7: #{tpu_custom_call.1} parent=1 // pred_check_branch
      %16 = sbr.rel (0) target = $region9
    $region8: #{tpu_custom_call.1} parent=1 // pred_region
      _
    $region9: #{tpu_custom_call.1} parent=1 // pred_fallthru
      _
    // Predicated region
    $region10: #{tpu_custom_call.1} parent=1 // pred_check
      _
    $region11: #{tpu_custom_call.1} parent=1 // pred_check_branch
      %18 = sbr.rel (0) target = $region13
    $region12: #{tpu_custom_call.1} parent=1 // pred_region
      _
    $region13: #{tpu_custom_call.1} parent=1 // pred_fallthru
      _
    // Predicated region
    $region14: #{tpu_custom_call.1} parent=1 // pred_check
      _
    $region15: #{tpu_custom_call.1} parent=1 // pred_check_branch
      %20 = sbr.rel (0) target = $region17
    $region16: #{tpu_custom_call.1} parent=1 // pred_region
      _
    $region17: #{tpu_custom_call.1} parent=1 // pred_fallthru
      _
    %v21 = vld [vmem:[%s0] sm:$0xff]
    %v22 = vld [vmem:[%s1] sm:$0xff]
    %v23 = vld [vmem:[%s1 + $0x8] sm:$0xff]
    %v24 = vld [vmem:[%s1 + $0x10] sm:$0xff]
    %v25 = vld [vmem:[%s1 + $0x18] sm:$0xff]
    %v26 = vld [vmem:[%s1 + $0x20] sm:$0xff]
    %v27 = vld [vmem:[%s1 + $0x28] sm:$0xff]
    %v28 = vld [vmem:[%s1 + $0x30] sm:$0xff]
    %v29 = vld [vmem:[%s1 + $0x38] sm:$0xff]
    %v30 = vld [vmem:[%s1 + $0x40] sm:$0xff]
    %v31 = vld [vmem:[%s1 + $0x48] sm:$0xff]
    %v32 = vld [vmem:[%s1 + $0x50] sm:$0xff]
    %v33 = vld [vmem:[%s1 + $0x58] sm:$0xff]
    %v34 = vld [vmem:[%s1 + $0x60] sm:$0xff]
    %v35 = vld [vmem:[%s1 + $0x68] sm:$0xff]
    %v36 = vld [vmem:[%s1 + $0x70] sm:$0xff]
    %v37 = vld [vmem:[%s1 + $0x78] sm:$0xff]
    %vm38 = vcmask 261120
    %v40 = vsel %vm38, %v21, 0
    %v43 = vsel %vm38, %v22, 0
    %v46 = vsel %vm38, %v23, 0
    %v49 = vsel %vm38, %v24, 0
    %v52 = vsel %vm38, %v25, 0
    %v55 = vsel %vm38, %v26, 0
    %v58 = vsel %vm38, %v27, 0
    %v61 = vsel %vm38, %v28, 0
    %v64 = vsel %vm38, %v29, 0
    %v67 = vsel %vm38, %v30, 0
    %v70 = vsel %vm38, %v31, 0
    %v73 = vsel %vm38, %v32, 0
    %v76 = vsel %vm38, %v33, 0
    %v79 = vsel %vm38, %v34, 0
    %v82 = vsel %vm38, %v35, 0
    %v85 = vsel %vm38, %v36, 0
    %v88 = vsel %vm38, %v37, 0
    %90 = vmatprep.subr.mxu0 0.0
    %91 = vmatpush1.xpose.msra.mxu0 %v43
    %92 = vmatprep.subr.mxu0 0.0
    %93 = vmatpush1.xpose.msra.mxu0 %v46
    %94 = vmatprep.subr.mxu0 0.0
    %95 = vmatpush1.xpose.msra.mxu0 %v49
    %96 = vmatprep.subr.mxu0 0.0
    %97 = vmatpush1.xpose.msra.mxu0 %v52
    %98 = vmatprep.subr.mxu0 0.0
    %99 = vmatpush1.xpose.msra.mxu0 %v55
    %100 = vmatprep.subr.mxu0 0.0
    %101 = vmatpush1.xpose.msra.mxu0 %v58
    %102 = vmatprep.subr.mxu0 0.0
    %103 = vmatpush1.xpose.msra.mxu0 %v61
    %104 = vmatprep.subr.mxu0 0.0
    %105 = vmatpush1.xpose.msra.mxu0 %v64
    %106 = vmatprep.subr.mxu0 0.0
    %107 = vmatpush1.xpose.msra.mxu0 %v67
    %108 = vmatprep.subr.mxu0 0.0
    %109 = vmatpush1.xpose.msra.mxu0 %v70
    %110 = vmatprep.subr.mxu0 0.0
    %111 = vmatpush1.xpose.msra.mxu0 %v73
    %112 = vmatprep.subr.mxu0 0.0
    %113 = vmatpush1.xpose.msra.mxu0 %v76
    %114 = vmatprep.subr.mxu0 0.0
    %115 = vmatpush1.xpose.msra.mxu0 %v79
    %116 = vmatprep.subr.mxu0 0.0
    %117 = vmatpush1.xpose.msra.mxu0 %v82
    %118 = vmatprep.subr.mxu0 0.0
    %119 = vmatpush1.xpose.msra.mxu0 %v85
    %120 = vmatprep.subr.mxu0 0.0
    %121 = vmatpush1.xpose.msra.mxu0 %v88
    %122 = vmatprep.subr.mxu0 0.0
    %123 = vmatpush1.xpose.msra.mxu0 0.0
    %124 = vmatprep.subr.mxu0 0.0
    %125 = vmatpush1.xpose.msra.mxu0 0.0
    %126 = vmatprep.subr.mxu0 0.0
    %127 = vmatpush1.xpose.msra.mxu0 0.0
    %128 = vmatprep.subr.mxu0 0.0
    %129 = vmatpush1.xpose.msra.mxu0 0.0
    %130 = vmatprep.subr.mxu0 0.0
    %131 = vmatpush1.xpose.msra.mxu0 0.0
    %132 = vmatprep.subr.mxu0 0.0
    %133 = vmatpush1.xpose.msra.mxu0 0.0
    %134 = vmatprep.subr.mxu0 0.0
    %135 = vmatpush1.xpose.msra.mxu0 0.0
    %136 = vmatprep.subr.mxu0 0.0
    %137 = vmatpush1.xpose.msra.mxu0 0.0
    %138 = vmatprep.subr.mxu0 0.0
    %139 = vmatpush1.xpose.msra.mxu0 0.0
    %140 = vmatprep.subr.mxu0 0.0
    %141 = vmatpush1.xpose.msra.mxu0 0.0
    %142 = vmatprep.subr.mxu0 0.0
    %143 = vmatpush1.xpose.msra.mxu0 0.0
    %144 = vmatprep.subr.mxu0 0.0
    %145 = vmatpush1.xpose.msra.mxu0 0.0
    %146 = vmatprep.subr.mxu0 0.0
    %147 = vmatpush1.xpose.msra.mxu0 0.0
    %148 = vmatprep.subr.mxu0 0.0
    %149 = vmatpush1.xpose.msra.mxu0 0.0
    %150 = vmatprep.subr.mxu0 0.0
    %151 = vmatpush1.xpose.msra.mxu0 0.0
    %152 = vmatprep.subr.mxu0 0.0
    %153 = vmatpush1.xpose.msra.mxu0 0.0
    %154 = vmatprep.mubr.f32.mxu0 0.0
    %155 = vmatmul.mubr.f32.gmra.mrb[0].mxu0 %v40
    %v156 = vpop.f32.mrb[0].mxu0
    %v157 = vadd.f32 0.0, %v156
    %v158 = vpop.f32.mrb[0].mxu0
    %159 = vdwg.mxu0
    %v160 = vmul.f32 %v21, %v21
    %v161 = vsel %vm38, %v160, 0.0
    %162 = vadd.xlane.f32.xlu0 %v161
    %v163 = vpop.xlane.xlu0 %162
    %v164 = vrsqrt.pop %v163
    %v165 = vmul.f32 %v163, %v164
    %vm166 = vcmp.eq.f32.partialorder %v163, inf
    %v167 = vsel %vm166, %v163, %v165
    %vm168 = vcmp.eq.f32.partialorder %v163, 0.0
    %v169 = vand.u32 %v163, 2147483648
    %v170 = vsel %vm168, %v169, %v167
    %v171 = vld [vmem:[%s2] sm:$0x1]
    %v172 = vrcp.pop %v170
    %v173 = vmul.f32 1.0, %v172
    %v174 = vrcp.pop %v171
    %v175 = vmul.f32 1.0, %v174
    %v177 = vlaneseq
    %v178 = vshrl.u32 %v177, 7
    %v179 = vsub.s32 0, %v178
    %v180 = vrot.slane %v171, %v179
    %v182 = vmul.f32 %v170, %v180
    %vm183 = vcmp.ge.f32.partialorder %v182, 1e-08
    %v185 = vlaneseq
    %v186 = vshrl.u32 %v185, 7
    %v187 = vsub.s32 0, %v186
    %v188 = vrot.slane %v175, %v187
    %v190 = vmul.f32 %v173, %v188
    %v191 = vsel %vm183, %v190, 1e+08
    %v192 = vmul.f32 %v157, %v191
    %v193 = vld [vmem:[%s3] sm:$0xff]
    %s194 = smul.u32 0, 128
    %v195 = vlaneseq
    %v196 = vand.u32 %v195, 127
    %v197 = vstv %s194
    %v198 = vadd.s32 %v197, %v196
    %v199 = vmul.f32 %v192, 30.0
    %200 = vset.pattern.permute.xlu0 0
    %201 = vperm.xlu0 %200, %v193
    %v202 = vpop.permute.xlu0 %201
    %vm203 = vcmp.eq.s32.totalorder %v198, %v202
    %v204 = vsub.f32 %v199, 12.0
    %v205 = vsel %vm203, %v204, %v199
    %206 = vst [vmem:[#allocation2] sm:$0xff] %v205
    %207 = vst [vmem:[#allocation4] sm:$0xff] %v157
    // Predicated region
    $region18: #{tpu_custom_call.1} parent=1 // pred_check
      _
    $region19: #{tpu_custom_call.1} parent=1 // pred_check_branch
      %209 = sbr.rel (0) target = $region21
    $region20: #{tpu_custom_call.1} parent=1 // pred_region
      %s211 = ssub.s32 128, 128
      %212 = vsyncadd [#allocation3], %s211
      %s214 = sshll.u32 [#allocation2], 4
      %s215 = int_to_ptr.vmem [resolvable:$true] %s214
      %217 = dma.vmem_to_hbm [thread:$0]  %s215, 128, %s4, [#allocation3]
    $region21: #{tpu_custom_call.1} parent=1 // pred_fallthru
      _
    // Predicated region
    $region22: #{tpu_custom_call.1} parent=1 // pred_check
      _
    $region23: #{tpu_custom_call.1} parent=1 // pred_check_branch
      %219 = sbr.rel (0) target = $region25
    $region24: #{tpu_custom_call.1} parent=1 // pred_region
      %s221 = ssub.s32 128, 128
      %222 = vsyncadd [#allocation5], %s221
      %s224 = sshll.u32 [#allocation4], 4
      %s225 = int_to_ptr.vmem [resolvable:$true] %s224
      %227 = dma.vmem_to_hbm [thread:$0]  %s225, 128, %s5, [#allocation5]
    $region25: #{tpu_custom_call.1} parent=1 // pred_fallthru
      _
    // Predicated region
    $region26: #{tpu_custom_call.1} parent=1 // pred_check
      _
    $region27: #{tpu_custom_call.1} parent=1 // pred_check_branch
      %229 = sbr.rel (0) target = $region29
    $region28: #{tpu_custom_call.1} parent=1 // pred_region
      %230 = dma.done [#allocation3], 128
    $region29: #{tpu_custom_call.1} parent=1 // pred_fallthru
      _
    // Predicated region
    $region30: #{tpu_custom_call.1} parent=1 // pred_check
      _
    $region31: #{tpu_custom_call.1} parent=1 // pred_check_branch
      %232 = sbr.rel (0) target = $region33
    $region32: #{tpu_custom_call.1} parent=1 // pred_region
      %233 = dma.done [#allocation5], 128
    $region33: #{tpu_custom_call.1} parent=1 // pred_fallthru
      _
    %234 = vsyncpa [#allocation3], 1
    %235 = vsyncpa [#allocation5], 1

</llo_original>
